<compile_context>
chip_gen: v5e
topology: v5e:2x2
jax: 0.10.0
libtpu: 0.0.40
codegen_flags: <defaults>
</compile_context>

<pallas_src>
import jax
import jax.numpy as jnp
import numpy as np
from jax.experimental import pallas as pl
from jax.experimental.pallas import tpu as pltpu

EMBEDDING_DIM = 100
N_INPUT_WORDS = 20
N_MEMORIES = 20
LANE = 128


def entnet_kernel(prelu_ref, x_ref, enc_ref, keys_ref, klhs_ref, rhs_ref, out_ref):
    """Single-shot EntNet forward.

    Shapes (Dp = embedding dim zero-padded to 128, KP = Nmem rounded up to 8):
      prelu_ref : (1,)          SMEM   PReLU slope
      x_ref     : (B, Nw, Dp)   story (padded lanes are zero)
      enc_ref   : (Nw, Dp)      encoder multiplier
      keys_ref  : (Nmem, Dp)    keys == freshly initialized memories
      klhs_ref  : (KP, 2*Dp)    [keys | 0]  (rows Nmem..KP-1 zero) — LHS top block
      rhs_ref   : (2*Dp, Dp)    [ (U+V)^T ; W^T ]
      out_ref   : (B, Nmem, Dp) updated memories, batch-major (sublane-dense)
    """
    a = prelu_ref[0]                                     # PReLU slope (scalar, SMEM)
    keys = keys_ref[...]                                 # (Nmem, Dp)
    nmem, dp = keys.shape
    kp = klhs_ref.shape[0]
    b_sz = x_ref.shape[0]

    # Story encoding: s = sum_w (x * enc) -> (B, Dp); padded lanes stay exactly 0.
    s = jnp.sum(x_ref[...] * enc_ref[...], axis=1)       # (B, Dp)

    # One fused K=2*Dp MXU matmul computes both candidate halves:
    #   fused[:Nmem]     = keys @ (U+V)^T
    #   fused[KP:KP+B]   = s @ W^T
    s_half = jnp.concatenate([jnp.zeros_like(s), s], axis=1)     # (B, 2*Dp)
    lhs = jnp.concatenate([klhs_ref[...], s_half], axis=0)       # (KP+B, 2*Dp)
    fused = jnp.dot(lhs, rhs_ref[...], preferred_element_type=jnp.float32)
    cuv = fused[:nmem, :]                                        # (Nmem, Dp)
    cw = fused[kp:kp + b_sz, :]                                  # (B, Dp)

    # Per-batch-row update in a sublane-dense (Nmem, Dp) layout (B is tiny & static).
    nrm_sq = jnp.zeros((nmem, 1), dtype=jnp.float32)
    m_rows = []
    for b in range(b_sz):                                # static Python loop, B = 2
        s_b = s[b:b + 1, :]                              # (1, Dp)
        # gate_i = sigmoid(2 * keys . s_b): VPU multiply + lane reduction (no MXU)
        sk = jnp.sum(keys * s_b, axis=-1, keepdims=True)         # (Nmem, 1)
        gate = jax.nn.sigmoid(sk + sk)
        pre = cuv + cw[b:b + 1, :]                                # (Nmem, Dp)
        cand = jnp.where(pre >= 0, pre, a * pre)                  # PReLU
        m_b = keys + cand * gate                                  # (Nmem, Dp)
        nrm_sq = nrm_sq + jnp.sum(m_b * m_b, axis=-1, keepdims=True)
        m_rows.append(m_b)

    # Frobenius norm per memory slot is taken over the whole (B, Dp) slab.
    inv = jax.lax.rsqrt(nrm_sq)                                   # (Nmem, 1)
    for b in range(b_sz):
        out_ref[b] = m_rows[b] * inv                              # lane-dense 128 stores


def prepare_entnet_params(enc_mult, keys, u_w, v_w, w_w, lane=LANE):
    """One-time (init-time) weight prep: U+V fusion, transposes, zero-pad 100 -> 128.

    The zero pads must stay exactly zero across parameter updates so that padded
    lanes of the memories remain zero and the Frobenius norm is unchanged.
    """
    nmem, d = keys.shape
    dp = ((d + lane - 1) // lane) * lane
    kp = ((nmem + 7) // 8) * 8
    pad = dp - d
    encp = jnp.pad(enc_mult, ((0, 0), (0, pad)))                          # (Nw, Dp)
    keysp = jnp.pad(keys, ((0, 0), (0, pad)))                             # (Nmem, Dp)
    uvt = jnp.pad((u_w + v_w).T, ((0, pad), (0, pad)))                    # (Dp, Dp)
    wt = jnp.pad(w_w.T, ((0, pad), (0, pad)))                             # (Dp, Dp)
    rhs = jnp.concatenate([uvt, wt], axis=0)                              # (2*Dp, Dp)
    klhs = jnp.zeros((kp, 2 * dp), jnp.float32).at[:nmem, :dp].set(keysp)  # (KP, 2*Dp)
    return encp, keysp, klhs, rhs


@jax.jit
def entnet_forward(x, prelu_a, encp, keysp, klhs, rhs):
    """Runs the EntNet forward pass.

    Returns the updated memories in the kernel's fast layout: (B, Nmem, Dp),
    batch-major, embedding zero-padded to Dp=128.  The PyTorch-equivalent view is
    out.transpose(1, 0, 2)[:, :, :D]; downstream consumers should prefer the padded
    layout (slicing/transposing per call costs an extra HBM round trip).
    """
    b_sz, _, d = x.shape
    nmem, dp = keysp.shape
    xp = jnp.pad(x, ((0, 0), (0, 0), (0, dp - d)))       # only per-call prep op
    vmem = pl.BlockSpec(memory_space=pltpu.MemorySpace.VMEM)
    smem = pl.BlockSpec(memory_space=pltpu.MemorySpace.SMEM)
    return pl.pallas_call(
        entnet_kernel,
        out_shape=jax.ShapeDtypeStruct((b_sz, nmem, dp), jnp.float32),
        in_specs=[smem, vmem, vmem, vmem, vmem, vmem],
        out_specs=vmem,
    )(prelu_a, xp, encp, keysp, klhs, rhs)


def entnet_ref(x, enc_mult, keys, u_w, v_w, w_w, a):
    """Pure-JAX reference mirroring the PyTorch forward() (f32, highest precision)."""
    hi = jax.lax.Precision.HIGHEST
    s = (x * enc_mult[None]).sum(axis=1)                          # (B, D)
    outs = []
    for i in range(keys.shape[0]):
        k = keys[i]                                               # (D,)
        gate = jax.nn.sigmoid(jnp.dot(s, k, precision=hi) + jnp.dot(s, k, precision=hi))
        pre = (jnp.dot(k, u_w.T, precision=hi) + jnp.dot(k, v_w.T, precision=hi)
               + jnp.dot(s, w_w.T, precision=hi))                 # (B, D)
        cand = jnp.where(pre >= 0, pre, a * pre)                  # PReLU
        m = k[None, :] + cand * gate[:, None]                     # (B, D)
        m = m / jnp.sqrt(jnp.sum(m * m))                          # torch.norm (Frobenius)
        outs.append(m)
    return jnp.stack(outs)                                        # (Nmem, B, D)


if __name__ == "__main__":
    B = 2
    key = jax.random.PRNGKey(0)
    k1, k2, k3, k4, k5 = jax.random.split(key, 5)

    # Deterministic synthetic parameters / inputs (matching __init__ shapes).
    x = jax.random.normal(k1, (B, N_INPUT_WORDS, EMBEDDING_DIM), dtype=jnp.float32)
    enc_mult = jnp.ones((N_INPUT_WORDS, EMBEDDING_DIM), dtype=jnp.float32)   # torch.ones
    keys = 0.1 * jax.random.normal(k2, (N_MEMORIES, EMBEDDING_DIM), dtype=jnp.float32)
    u_w = 0.1 * jax.random.normal(k3, (EMBEDDING_DIM, EMBEDDING_DIM), dtype=jnp.float32)
    v_w = 0.1 * jax.random.normal(k4, (EMBEDDING_DIM, EMBEDDING_DIM), dtype=jnp.float32)
    w_w = 0.1 * jax.random.normal(k5, (EMBEDDING_DIM, EMBEDDING_DIM), dtype=jnp.float32)
    prelu_a = jnp.ones((1,), dtype=jnp.float32)                              # nn.PReLU(init=1)

    # TODO(synk): decode() (softmax read-out + R/H projections) is a separate method,
    # not part of forward(); not implemented here.

    # Init-time weight preparation (hoisted out of the per-call path).
    encp, keysp, klhs, rhs = prepare_entnet_params(enc_mult, keys, u_w, v_w, w_w)

    out = entnet_forward(x, prelu_a, encp, keysp, klhs, rhs)    # (B, Nmem, Dp) padded
    jax.block_until_ready(out)

    # Test-only: materialize the PyTorch-layout view and compare with the reference.
    out_sem = np.asarray(out).transpose(1, 0, 2)[:, :, :EMBEDDING_DIM]
    ref = np.asarray(entnet_ref(x, enc_mult, keys, u_w, v_w, w_w, float(prelu_a[0])))
    assert out_sem.shape == (N_MEMORIES, B, EMBEDDING_DIM)
    np.testing.assert_allclose(out_sem, ref, rtol=1e-5, atol=1e-5)
    print("KERNEL_OK")
</pallas_src>

<mosaic_0001>
module attributes {stable_mosaic.version = 11 : i64} {
  func.func @entnet_kernel(%arg0: memref<1xf32, #tpu.memory_space<smem>>, %arg1: memref<2x20x128xf32, #tpu.memory_space<vmem>>, %arg2: memref<20x128xf32, #tpu.memory_space<vmem>>, %arg3: memref<20x128xf32, #tpu.memory_space<vmem>>, %arg4: memref<24x256xf32, #tpu.memory_space<vmem>>, %arg5: memref<256x128xf32, #tpu.memory_space<vmem>>, %arg6: memref<2x20x128xf32, #tpu.memory_space<vmem>>) attributes {dimension_semantics = [], scalar_prefetch = 0 : i64, scratch_operands = 0 : i64, tpu.core_type = #tpu.core_type<tc>} {
    %c0 = arith.constant 0 : index
    %0 = memref.load %arg0[%c0] : memref<1xf32, #tpu.memory_space<smem>>
    %c0_0 = arith.constant 0 : index
    %c0_1 = arith.constant 0 : index
    %1 = vector.load %arg3[%c0_0, %c0_1] : memref<20x128xf32, #tpu.memory_space<vmem>>, vector<20x128xf32>
    %c0_2 = arith.constant 0 : index
    %c0_3 = arith.constant 0 : index
    %c0_4 = arith.constant 0 : index
    %2 = vector.load %arg1[%c0_2, %c0_3, %c0_4] : memref<2x20x128xf32, #tpu.memory_space<vmem>>, vector<2x20x128xf32>
    %c0_5 = arith.constant 0 : index
    %c0_6 = arith.constant 0 : index
    %3 = vector.load %arg2[%c0_5, %c0_6] : memref<20x128xf32, #tpu.memory_space<vmem>>, vector<20x128xf32>
    %4 = vector.shape_cast %3 : vector<20x128xf32> to vector<1x20x128xf32>
    %5 = vector.broadcast %4 : vector<1x20x128xf32> to vector<2x20x128xf32>
    %6 = arith.mulf %2, %5 : vector<2x20x128xf32>
    %cst = arith.constant dense<0.000000e+00> : vector<2x128xf32>
    %7 = vector.multi_reduction <add>, %6, %cst [1] : vector<2x20x128xf32> to vector<2x128xf32>
    %cst_7 = arith.constant 0.000000e+00 : f32
    %8 = vector.broadcast %cst_7 : f32 to vector<2x128xf32>
    %9 = tpu.concatenate %8, %7 in 1 : vector<2x128xf32>, vector<2x128xf32> -> vector<2x256xf32>
    %c0_8 = arith.constant 0 : index
    %c0_9 = arith.constant 0 : index
    %10 = vector.load %arg4[%c0_8, %c0_9] : memref<24x256xf32, #tpu.memory_space<vmem>>, vector<24x256xf32>
    %11 = tpu.concatenate %10, %9 in 0 : vector<24x256xf32>, vector<2x256xf32> -> vector<26x256xf32>
    %c0_10 = arith.constant 0 : index
    %c0_11 = arith.constant 0 : index
    %12 = vector.load %arg5[%c0_10, %c0_11] : memref<256x128xf32, #tpu.memory_space<vmem>>, vector<256x128xf32>
    %cst_12 = arith.constant dense<0.000000e+00> : vector<26x128xf32>
    %13 = tpu.matmul %11, %12, %cst_12 {dimension_numbers = #tpu.dot_dimension_numbers<[1], [0], [0], [1], [0, 0, 1, 1], [], []>} : vector<26x256xf32>, vector<256x128xf32>, vector<26x128xf32> -> vector<26x128xf32>
    %14 = vector.extract_strided_slice %13 {offsets = [0, 0], sizes = [20, 128], strides = [1, 1]} : vector<26x128xf32> to vector<20x128xf32>
    %15 = vector.extract_strided_slice %13 {offsets = [24, 0], sizes = [2, 128], strides = [1, 1]} : vector<26x128xf32> to vector<2x128xf32>
    %cst_13 = arith.constant 0.000000e+00 : f32
    %16 = vector.broadcast %cst_13 : f32 to vector<20x1xf32>
    %17 = vector.extract_strided_slice %7 {offsets = [0, 0], sizes = [1, 128], strides = [1, 1]} : vector<2x128xf32> to vector<1x128xf32>
    %18 = vector.broadcast %17 : vector<1x128xf32> to vector<20x128xf32>
    %19 = arith.mulf %1, %18 : vector<20x128xf32>
    %cst_14 = arith.constant dense<0.000000e+00> : vector<20xf32>
    %20 = vector.multi_reduction <add>, %19, %cst_14 [1] : vector<20x128xf32> to vector<20xf32>
    %21 = vector.shape_cast %20 : vector<20xf32> to vector<20x1xf32>
    %22 = arith.addf %21, %21 : vector<20x1xf32>
    %23 = arith.negf %22 : vector<20x1xf32>
    %24 = math.exp %23 : vector<20x1xf32>
    %cst_15 = arith.constant 1.000000e+00 : f32
    %25 = vector.broadcast %cst_15 : f32 to vector<20x1xf32>
    %26 = arith.addf %25, %24 : vector<20x1xf32>
    %27 = arith.divf %25, %26 : vector<20x1xf32>
    %28 = vector.extract_strided_slice %15 {offsets = [0, 0], sizes = [1, 128], strides = [1, 1]} : vector<2x128xf32> to vector<1x128xf32>
    %29 = vector.broadcast %28 : vector<1x128xf32> to vector<20x128xf32>
    %30 = arith.addf %14, %29 : vector<20x128xf32>
    %cst_16 = arith.constant 0.000000e+00 : f32
    %31 = vector.broadcast %cst_16 : f32 to vector<20x128xf32>
    %32 = arith.cmpf oge, %30, %31 : vector<20x128xf32>
    %33 = vector.broadcast %0 : f32 to vector<20x128xf32>
    %34 = arith.mulf %33, %30 : vector<20x128xf32>
    %35 = arith.select %32, %30, %34 : vector<20x128xi1>, vector<20x128xf32>
    %36 = vector.broadcast %27 : vector<20x1xf32> to vector<20x128xf32>
    %37 = arith.mulf %35, %36 : vector<20x128xf32>
    %38 = arith.addf %1, %37 : vector<20x128xf32>
    %39 = arith.mulf %38, %38 : vector<20x128xf32>
    %cst_17 = arith.constant dense<0.000000e+00> : vector<20xf32>
    %40 = vector.multi_reduction <add>, %39, %cst_17 [1] : vector<20x128xf32> to vector<20xf32>
    %41 = vector.shape_cast %40 : vector<20xf32> to vector<20x1xf32>
    %42 = arith.addf %16, %41 : vector<20x1xf32>
    %43 = vector.extract_strided_slice %7 {offsets = [1, 0], sizes = [1, 128], strides = [1, 1]} : vector<2x128xf32> to vector<1x128xf32>
    %44 = vector.broadcast %43 : vector<1x128xf32> to vector<20x128xf32>
    %45 = arith.mulf %1, %44 : vector<20x128xf32>
    %cst_18 = arith.constant dense<0.000000e+00> : vector<20xf32>
    %46 = vector.multi_reduction <add>, %45, %cst_18 [1] : vector<20x128xf32> to vector<20xf32>
    %47 = vector.shape_cast %46 : vector<20xf32> to vector<20x1xf32>
    %48 = arith.addf %47, %47 : vector<20x1xf32>
    %49 = arith.negf %48 : vector<20x1xf32>
    %50 = math.exp %49 : vector<20x1xf32>
    %cst_19 = arith.constant 1.000000e+00 : f32
    %51 = vector.broadcast %cst_19 : f32 to vector<20x1xf32>
    %52 = arith.addf %51, %50 : vector<20x1xf32>
    %53 = arith.divf %51, %52 : vector<20x1xf32>
    %54 = vector.extract_strided_slice %15 {offsets = [1, 0], sizes = [1, 128], strides = [1, 1]} : vector<2x128xf32> to vector<1x128xf32>
    %55 = vector.broadcast %54 : vector<1x128xf32> to vector<20x128xf32>
    %56 = arith.addf %14, %55 : vector<20x128xf32>
    %cst_20 = arith.constant 0.000000e+00 : f32
    %57 = vector.broadcast %cst_20 : f32 to vector<20x128xf32>
    %58 = arith.cmpf oge, %56, %57 : vector<20x128xf32>
    %59 = vector.broadcast %0 : f32 to vector<20x128xf32>
    %60 = arith.mulf %59, %56 : vector<20x128xf32>
    %61 = arith.select %58, %56, %60 : vector<20x128xi1>, vector<20x128xf32>
    %62 = vector.broadcast %53 : vector<20x1xf32> to vector<20x128xf32>
    %63 = arith.mulf %61, %62 : vector<20x128xf32>
    %64 = arith.addf %1, %63 : vector<20x128xf32>
    %65 = arith.mulf %64, %64 : vector<20x128xf32>
    %cst_21 = arith.constant dense<0.000000e+00> : vector<20xf32>
    %66 = vector.multi_reduction <add>, %65, %cst_21 [1] : vector<20x128xf32> to vector<20xf32>
    %67 = vector.shape_cast %66 : vector<20xf32> to vector<20x1xf32>
    %68 = arith.addf %42, %67 : vector<20x1xf32>
    %69 = math.rsqrt %68 : vector<20x1xf32>
    %70 = vector.broadcast %69 : vector<20x1xf32> to vector<20x128xf32>
    %71 = arith.mulf %38, %70 : vector<20x128xf32>
    %c0_22 = arith.constant 0 : index
    %c0_23 = arith.constant 0 : index
    %c0_24 = arith.constant 0 : index
    %72 = vector.load %arg6[%c0_22, %c0_23, %c0_24] : memref<2x20x128xf32, #tpu.memory_space<vmem>>, vector<1x20x128xf32>
    %73 = vector.shape_cast %72 : vector<1x20x128xf32> to vector<20x128xf32>
    %74 = vector.shape_cast %71 : vector<20x128xf32> to vector<1x20x128xf32>
    tpu.vector_store %arg6[%c0_22, %c0_23, %c0_24], %74 {strides = array<i32>} : memref<2x20x128xf32, #tpu.memory_space<vmem>>, vector<1x20x128xf32>,
    %75 = vector.broadcast %69 : vector<20x1xf32> to vector<20x128xf32>
    %76 = arith.mulf %64, %75 : vector<20x128xf32>
    %c1 = arith.constant 1 : index
    %c0_25 = arith.constant 0 : index
    %c0_26 = arith.constant 0 : index
    %77 = vector.load %arg6[%c1, %c0_25, %c0_26] : memref<2x20x128xf32, #tpu.memory_space<vmem>>, vector<1x20x128xf32>
    %78 = vector.shape_cast %77 : vector<1x20x128xf32> to vector<20x128xf32>
    %79 = vector.shape_cast %76 : vector<20x128xf32> to vector<1x20x128xf32>
    tpu.vector_store %arg6[%c1, %c0_25, %c0_26], %79 {strides = array<i32>} : memref<2x20x128xf32, #tpu.memory_space<vmem>>, vector<1x20x128xf32>,
    return
  }
}

</mosaic_0001>

<llo_original>
// kernel: entnet_forward.1
$region0: #{entnet_forward.1}
  #allocation0 [shape = 'u32[]', space=smem, size = 0x4, offset = 0x4, fixed_abs, tag = 'smem constant byte address 0x4 - core index']
  #allocation1 [shape = 'u32[72,128]{1,0:T(1,128)}', space=vmem, size = 0x9000, scoped, tag = 'internal scratch']
  #allocation2 [shape = 'f32[1]{0:T(128)S(6)}', space=smem, size = 0x200, scoped, tag = 'scoped memory for entnet_forward.1']
  %s0 = inlined_call_operand.<no memory space> [shape: f32[1], index: 0, kind: input, shape index: {}]
  %s1 = inlined_call_operand.vmem [shape: f32[2,20,128], index: 1, kind: input, shape index: {}]
  %s2 = inlined_call_operand.vmem [shape: f32[20,128], index: 2, kind: input, shape index: {}]
  %s3 = inlined_call_operand.vmem [shape: f32[20,128], index: 3, kind: input, shape index: {}]
  %s4 = inlined_call_operand.vmem [shape: f32[24,256], index: 4, kind: input, shape index: {}]
  %s5 = inlined_call_operand.hbm [shape: f32[256,128], index: 5, kind: input, shape index: {}]
  %s6 = inlined_call_operand.vmem [shape: f32[2,20,128], index: 6, kind: output, shape index: {}]
  %s7 = sld [smem:[#allocation0]]
  $region38: #{entnet_forward.1} parent=0
    _
  %s9 = ssub.s32 1, %s7
  %s10 = scalar_select 0, %s9, %s7
  %11 = sst [smem:[#allocation2]] %s0
  $region1: #{entnet_forward.1} parent=0
    #allocation3 [shape = 'u8[131072]{0}', space=vmem, size = 0x20000, scoped, tag = 'input window, operand 5, single buffered']
    #allocation4 [shape = 's32[1]{0}', space=sflag, size = 0x4, scoped, tag = 'scoped memory for entnet_forward.1']
    %12 = vsyncpa [#allocation4], 0
    // Predicated region
    $region2: #{entnet_forward.1} parent=1 // pred_check
      _
    $region3: #{entnet_forward.1} parent=1 // pred_check_branch
      %14 = sbr.rel (0) target = $region5
    $region4: #{entnet_forward.1} parent=1 // pred_region
      _
    $region5: #{entnet_forward.1} parent=1 // pred_fallthru
      _
    // Predicated region
    $region6: #{entnet_forward.1} parent=1 // pred_check
      _
    $region7: #{entnet_forward.1} parent=1 // pred_check_branch
      %16 = sbr.rel (0) target = $region9
    $region8: #{entnet_forward.1} parent=1 // pred_region
      _
    $region9: #{entnet_forward.1} parent=1 // pred_fallthru
      _
    // Predicated region
    $region10: #{entnet_forward.1} parent=1 // pred_check
      _
    $region11: #{entnet_forward.1} parent=1 // pred_check_branch
      %18 = sbr.rel (0) target = $region13
    $region12: #{entnet_forward.1} parent=1 // pred_region
      _
    $region13: #{entnet_forward.1} parent=1 // pred_fallthru
      _
    // Predicated region
    $region14: #{entnet_forward.1} parent=1 // pred_check
      _
    $region15: #{entnet_forward.1} parent=1 // pred_check_branch
      %20 = sbr.rel (0) target = $region17
    $region16: #{entnet_forward.1} parent=1 // pred_region
      _
    $region17: #{entnet_forward.1} parent=1 // pred_fallthru
      _
    // Predicated region
    $region18: #{entnet_forward.1} parent=1 // pred_check
      _
    $region19: #{entnet_forward.1} parent=1 // pred_check_branch
      %22 = sbr.rel (0) target = $region21
    $region20: #{entnet_forward.1} parent=1 // pred_region
      _
    $region21: #{entnet_forward.1} parent=1 // pred_fallthru
      _
    // Predicated region
    $region22: #{entnet_forward.1} parent=1 // pred_check
      _
    $region23: #{entnet_forward.1} parent=1 // pred_check_branch
      %24 = sbr.rel (0) target = $region25
    $region24: #{entnet_forward.1} parent=1 // pred_region
      %26 = vsyncadd [#allocation4], 0
      %s27 = sshll.u32 %s5, 4
      %s28 = int_to_ptr.hbm [resolvable:$true] %s27
      %s29 = sshll.u32 [#allocation3], 4
      %s30 = int_to_ptr.vmem [resolvable:$true] %s29
      %35 = dma.hbm_to_vmem [thread:$0]  %s28, 4096, %s30, [#allocation4], 128, 128, 8
    $region25: #{entnet_forward.1} parent=1 // pred_fallthru
      _
    // Predicated region
    $region26: #{entnet_forward.1} parent=1 // pred_check
      _
    $region27: #{entnet_forward.1} parent=1 // pred_check_branch
      %37 = sbr.rel (0) target = $region29
    $region28: #{entnet_forward.1} parent=1 // pred_region
      %39 = dma.done [#allocation4], 4096
    $region29: #{entnet_forward.1} parent=1 // pred_fallthru
      _
    %s40 = sld [smem:[#allocation2]]
    %v41 = vld [vmem:[%s3] sm:$0xff]
    %v42 = vld [vmem:[%s3 + $0x8] sm:$0xff]
    %v43 = vld [vmem:[%s3 + $0x10] sm:$0xf]
    %v44 = vld [vmem:[%s1] sm:$0xff]
    %v45 = vld [vmem:[%s1 + $0x8] sm:$0xff]
    %v46 = vld [vmem:[%s1 + $0x10] sm:$0xf]
    %v47 = vld [vmem:[%s1 + $0x18] sm:$0xff]
    %v48 = vld [vmem:[%s1 + $0x20] sm:$0xff]
    %v49 = vld [vmem:[%s1 + $0x28] sm:$0xf]
    %v50 = vld [vmem:[%s2] sm:$0xff]
    %v51 = vld [vmem:[%s2 + $0x8] sm:$0xff]
    %v52 = vld [vmem:[%s2 + $0x10] sm:$0xf]
    %v53 = vmul.f32 %v44, %v50
    %v54 = vmul.f32 %v45, %v51
    %v55 = vmul.f32 %v46, %v52
    %v56 = vmul.f32 %v47, %v50
    %v57 = vmul.f32 %v48, %v51
    %v58 = vmul.f32 %v49, %v52
    %v59 = vadd.f32 %v53, %v54
    %vm60 = vcmask 1043456
    %v61 = vsel %vm60, %v55, 0.0
    %v62 = vadd.f32 %v59, %v61
    %v63 = vrot.slane %v62, 4
    %v64 = vadd.f32 %v62, %v63
    %v65 = vrot.slane %v64, 2
    %v66 = vadd.f32 %v64, %v65
    %v67 = vrot.slane %v66, 1
    %v68 = vadd.f32 %v66, %v67
    %v69 = vadd.f32 %v56, %v57
    %v70 = vsel %vm60, %v58, 0.0
    %v71 = vadd.f32 %v69, %v70
    %v72 = vrot.slane %v71, 4
    %v73 = vadd.f32 %v71, %v72
    %v74 = vrot.slane %v73, 2
    %v75 = vadd.f32 %v73, %v74
    %v76 = vrot.slane %v75, 1
    %v77 = vadd.f32 %v75, %v76
    %vm80 = vcmask 1041409
    %v81 = vsel %vm80, %v77, %v68
    %v83 = vld [vmem:[%s4] sm:$0xff]
    %v84 = vld [vmem:[%s4 + $0x8] sm:$0xff]
    %v85 = vld [vmem:[%s4 + $0x10] sm:$0xff]
    %v86 = vld [vmem:[%s4 + $0x18] sm:$0xff]
    %v87 = vld [vmem:[%s4 + $0x20] sm:$0xff]
    %v88 = vld [vmem:[%s4 + $0x28] sm:$0xff]
    %v89 = vld [vmem:[#allocation3] sm:$0xff]
    %v90 = vld [vmem:[#allocation3 + $0x8] sm:$0xff]
    %v91 = vld [vmem:[#allocation3 + $0x10] sm:$0xff]
    %v92 = vld [vmem:[#allocation3 + $0x18] sm:$0xff]
    %v93 = vld [vmem:[#allocation3 + $0x20] sm:$0xff]
    %v94 = vld [vmem:[#allocation3 + $0x28] sm:$0xff]
    %v95 = vld [vmem:[#allocation3 + $0x30] sm:$0xff]
    %v96 = vld [vmem:[#allocation3 + $0x38] sm:$0xff]
    %v97 = vld [vmem:[#allocation3 + $0x40] sm:$0xff]
    %v98 = vld [vmem:[#allocation3 + $0x48] sm:$0xff]
    %v99 = vld [vmem:[#allocation3 + $0x50] sm:$0xff]
    %v100 = vld [vmem:[#allocation3 + $0x58] sm:$0xff]
    %v101 = vld [vmem:[#allocation3 + $0x60] sm:$0xff]
    %v102 = vld [vmem:[#allocation3 + $0x68] sm:$0xff]
    %v103 = vld [vmem:[#allocation3 + $0x70] sm:$0xff]
    %v104 = vld [vmem:[#allocation3 + $0x78] sm:$0xff]
    %v105 = vld [vmem:[#allocation3 + $0x80] sm:$0xff]
    %v106 = vld [vmem:[#allocation3 + $0x88] sm:$0xff]
    %v107 = vld [vmem:[#allocation3 + $0x90] sm:$0xff]
    %v108 = vld [vmem:[#allocation3 + $0x98] sm:$0xff]
    %v109 = vld [vmem:[#allocation3 + $0xa0] sm:$0xff]
    %v110 = vld [vmem:[#allocation3 + $0xa8] sm:$0xff]
    %v111 = vld [vmem:[#allocation3 + $0xb0] sm:$0xff]
    %v112 = vld [vmem:[#allocation3 + $0xb8] sm:$0xff]
    %v113 = vld [vmem:[#allocation3 + $0xc0] sm:$0xff]
    %v114 = vld [vmem:[#allocation3 + $0xc8] sm:$0xff]
    %v115 = vld [vmem:[#allocation3 + $0xd0] sm:$0xff]
    %v116 = vld [vmem:[#allocation3 + $0xd8] sm:$0xff]
    %v117 = vld [vmem:[#allocation3 + $0xe0] sm:$0xff]
    %v118 = vld [vmem:[#allocation3 + $0xe8] sm:$0xff]
    %v119 = vld [vmem:[#allocation3 + $0xf0] sm:$0xff]
    %v120 = vld [vmem:[#allocation3 + $0xf8] sm:$0xff]
    %121 = vmatpush.msra.mxu0 %v104
    %122 = vmatpush.msra.mxu0 %v103
    %123 = vmatpush.msra.mxu0 %v102
    %124 = vmatpush.msra.mxu0 %v101
    %125 = vmatpush.msra.mxu0 %v100
    %126 = vmatpush.msra.mxu0 %v99
    %127 = vmatpush.msra.mxu0 %v98
    %128 = vmatpush.msra.mxu0 %v97
    %129 = vmatpush.msra.mxu0 %v96
    %130 = vmatpush.msra.mxu0 %v95
    %131 = vmatpush.msra.mxu0 %v94
    %132 = vmatpush.msra.mxu0 %v93
    %133 = vmatpush.msra.mxu0 %v92
    %134 = vmatpush.msra.mxu0 %v91
    %135 = vmatpush.msra.mxu0 %v90
    %136 = vmatpush.msra.mxu0 %v89
    %137 = vmatmul.f32.gmra.mxu0 %v83
    %v138 = vpop.f32.mrf.mxu0
    %v139 = vadd.f32 0.0, %v138
    %140 = vmatmul.f32.gmra.mxu0 %v85
    %v141 = vpop.f32.mrf.mxu0
    %v142 = vadd.f32 0.0, %v141
    %143 = vmatmul.f32.gmra.mxu0 %v87
    %v144 = vpop.f32.mrf.mxu0
    %v145 = vadd.f32 0.0, %v144
    %146 = vmatmul.f32.gmra.mxu0 0.0
    %v147 = vpop.f32.mrf.mxu0
    %v148 = vadd.f32 0.0, %v147
    %149 = vdwg.mxu0
    %150 = vmatpush.msra.mxu0 %v120
    %151 = vmatpush.msra.mxu0 %v119
    %152 = vmatpush.msra.mxu0 %v118
    %153 = vmatpush.msra.mxu0 %v117
    %154 = vmatpush.msra.mxu0 %v116
    %155 = vmatpush.msra.mxu0 %v115
    %156 = vmatpush.msra.mxu0 %v114
    %157 = vmatpush.msra.mxu0 %v113
    %158 = vmatpush.msra.mxu0 %v112
    %159 = vmatpush.msra.mxu0 %v111
    %160 = vmatpush.msra.mxu0 %v110
    %161 = vmatpush.msra.mxu0 %v109
    %162 = vmatpush.msra.mxu0 %v108
    %163 = vmatpush.msra.mxu0 %v107
    %164 = vmatpush.msra.mxu0 %v106
    %165 = vmatpush.msra.mxu0 %v105
    %166 = vmatmul.f32.gmra.mxu0 %v84
    %v167 = vpop.f32.mrf.mxu0
    %v168 = vadd.f32 %v139, %v167
    %169 = vmatmul.f32.gmra.mxu0 %v86
    %v170 = vpop.f32.mrf.mxu0
    %v171 = vadd.f32 %v142, %v170
    %172 = vmatmul.f32.gmra.mxu0 %v88
    %v173 = vpop.f32.mrf.mxu0
    %v174 = vadd.f32 %v145, %v173
    %175 = vmatmul.f32.gmra.mxu0 %v81
    %v176 = vpop.f32.mrf.mxu0
    %v177 = vadd.f32 %v148, %v176
    %178 = vdwg.mxu0
    %v179 = vmul.f32 %v41, %v68
    %v180 = vmul.f32 %v42, %v68
    %v181 = vmul.f32 %v43, %v68
    %182 = vadd.xlane.f32.xlu0 %v179
    %v183 = vpop.xlane.xlu0 %182
    %184 = vadd.xlane.f32.xlu0 %v180
    %v185 = vpop.xlane.xlu0 %184
    %v186 = vsel %vm60, %v181, 0.0
    %187 = vadd.xlane.f32.xlu0 %v186
    %v188 = vpop.xlane.xlu0 %187
    %v189 = vadd.f32 %v183, %v183
    %v190 = vadd.f32 %v185, %v185
    %v191 = vadd.f32 %v188, %v188
    %v192 = vxor.u32 %v189, 2147483648
    %v193 = vxor.u32 %v190, 2147483648
    %v194 = vxor.u32 %v191, 2147483648
    %v195 = vmul.f32 %v192, 1.442695
    %v196 = vpow.pop %v195
    %v197 = vmul.f32 %v193, 1.442695
    %v198 = vpow.pop %v197
    %v199 = vmul.f32 %v194, 1.442695
    %v200 = vpow.pop %v199
    %v201 = vadd.f32 %v196, 1.0
    %v202 = vadd.f32 %v198, 1.0
    %v203 = vadd.f32 %v200, 1.0
    %v204 = vrcp.pop %v201
    %v205 = vmul.f32 %v201, %v204
    %v206 = vsub.f32 1.0, %v205
    %v207 = vmul.f32 %v204, %v206
    %v208 = vadd.f32 %v204, %v207
    %vm209 = vweird.f32 %v201
    %vm210 = vweird.f32 %v204
    %vm211 = vmor %vm209, %vm210
    %v212 = vsel %vm211, %v204, %v208
    %v213 = vand.u32 2147483647, %v201
    %vm214 = vcmp.eq.f32.partialorder %v213, 8.507059e+37
    %v215 = vand.u32 %v201, 2147483648
    %v216 = vor.u32 1.1754944e-38, %v215
    %v217 = vsel %vm214, %v216, %v212
    %v218 = vmul.f32 1.0, %v217
    %v219 = vrcp.pop %v202
    %v220 = vmul.f32 %v202, %v219
    %v221 = vsub.f32 1.0, %v220
    %v222 = vmul.f32 %v219, %v221
    %v223 = vadd.f32 %v219, %v222
    %vm224 = vweird.f32 %v202
    %vm225 = vweird.f32 %v219
    %vm226 = vmor %vm224, %vm225
    %v227 = vsel %vm226, %v219, %v223
    %v228 = vand.u32 2147483647, %v202
    %vm229 = vcmp.eq.f32.partialorder %v228, 8.507059e+37
    %v230 = vand.u32 %v202, 2147483648
    %v231 = vor.u32 1.1754944e-38, %v230
    %v232 = vsel %vm229, %v231, %v227
    %v233 = vmul.f32 1.0, %v232
    %v234 = vrcp.pop %v203
    %v235 = vmul.f32 %v203, %v234
    %v236 = vsub.f32 1.0, %v235
    %v237 = vmul.f32 %v234, %v236
    %v238 = vadd.f32 %v234, %v237
    %vm239 = vweird.f32 %v203
    %vm240 = vweird.f32 %v234
    %vm241 = vmor %vm239, %vm240
    %v242 = vsel %vm241, %v234, %v238
    %v243 = vand.u32 2147483647, %v203
    %vm244 = vcmp.eq.f32.partialorder %v243, 8.507059e+37
    %v245 = vand.u32 %v203, 2147483648
    %v246 = vor.u32 1.1754944e-38, %v245
    %v247 = vsel %vm244, %v246, %v242
    %v248 = vmul.f32 1.0, %v247
    %v249 = vperm.slane %v177, 0
    %v250 = vadd.f32 %v168, %v249
    %v251 = vadd.f32 %v171, %v249
    %v252 = vadd.f32 %v174, %v249
    %vm253 = vcmp.ge.f32.partialorder %v250, 0.0
    %vm254 = vcmp.ge.f32.partialorder %v251, 0.0
    %vm255 = vcmp.ge.f32.partialorder %v252, 0.0
    %v256 = vstv %s40
    %v257 = vmul.f32 %v256, %v250
    %v258 = vmul.f32 %v256, %v251
    %v259 = vmul.f32 %v256, %v252
    %v260 = vsel %vm253, %v250, %v257
    %v261 = vsel %vm254, %v251, %v258
    %v262 = vsel %vm255, %v252, %v259
    %v263 = vmul.f32 %v260, %v218
    %v264 = vmul.f32 %v261, %v233
    %v265 = vmul.f32 %v262, %v248
    %v266 = vadd.f32 %v41, %v263
    %v267 = vadd.f32 %v42, %v264
    %v268 = vadd.f32 %v43, %v265
    %v269 = vmul.f32 %v266, %v266
    %v270 = vmul.f32 %v267, %v267
    %v271 = vmul.f32 %v268, %v268
    %272 = vadd.xlane.f32.xlu0 %v269
    %v273 = vpop.xlane.xlu0 %272
    %274 = vadd.xlane.f32.xlu0 %v270
    %v275 = vpop.xlane.xlu0 %274
    %v276 = vsel %vm60, %v271, 0.0
    %277 = vadd.xlane.f32.xlu0 %v276
    %v278 = vpop.xlane.xlu0 %277
    %v279 = vadd.f32 %v273, 0.0
    %v280 = vadd.f32 %v275, 0.0
    %v281 = vadd.f32 %v278, 0.0
    %v282 = vmul.f32 %v41, %v77
    %v283 = vmul.f32 %v42, %v77
    %v284 = vmul.f32 %v43, %v77
    %285 = vadd.xlane.f32.xlu0 %v282
    %v286 = vpop.xlane.xlu0 %285
    %287 = vadd.xlane.f32.xlu0 %v283
    %v288 = vpop.xlane.xlu0 %287
    %v289 = vsel %vm60, %v284, 0.0
    %290 = vadd.xlane.f32.xlu0 %v289
    %v291 = vpop.xlane.xlu0 %290
    %v292 = vadd.f32 %v286, %v286
    %v293 = vadd.f32 %v288, %v288
    %v294 = vadd.f32 %v291, %v291
    %v295 = vxor.u32 %v292, 2147483648
    %v296 = vxor.u32 %v293, 2147483648
    %v297 = vxor.u32 %v294, 2147483648
    %v298 = vmul.f32 %v295, 1.442695
    %v299 = vpow.pop %v298
    %v300 = vmul.f32 %v296, 1.442695
    %v301 = vpow.pop %v300
    %v302 = vmul.f32 %v297, 1.442695
    %v303 = vpow.pop %v302
    %v304 = vadd.f32 %v299, 1.0
    %v305 = vadd.f32 %v301, 1.0
    %v306 = vadd.f32 %v303, 1.0
    %v307 = vrcp.pop %v304
    %v308 = vmul.f32 %v304, %v307
    %v309 = vsub.f32 1.0, %v308
    %v310 = vmul.f32 %v307, %v309
    %v311 = vadd.f32 %v307, %v310
    %vm312 = vweird.f32 %v304
    %vm313 = vweird.f32 %v307
    %vm314 = vmor %vm312, %vm313
    %v315 = vsel %vm314, %v307, %v311
    %v316 = vand.u32 2147483647, %v304
    %vm317 = vcmp.eq.f32.partialorder %v316, 8.507059e+37
    %v318 = vand.u32 %v304, 2147483648
    %v319 = vor.u32 1.1754944e-38, %v318
    %v320 = vsel %vm317, %v319, %v315
    %v321 = vmul.f32 1.0, %v320
    %v322 = vrcp.pop %v305
    %v323 = vmul.f32 %v305, %v322
    %v324 = vsub.f32 1.0, %v323
    %v325 = vmul.f32 %v322, %v324
    %v326 = vadd.f32 %v322, %v325
    %vm327 = vweird.f32 %v305
    %vm328 = vweird.f32 %v322
    %vm329 = vmor %vm327, %vm328
    %v330 = vsel %vm329, %v322, %v326
    %v331 = vand.u32 2147483647, %v305
    %vm332 = vcmp.eq.f32.partialorder %v331, 8.507059e+37
    %v333 = vand.u32 %v305, 2147483648
    %v334 = vor.u32 1.1754944e-38, %v333
    %v335 = vsel %vm332, %v334, %v330
    %v336 = vmul.f32 1.0, %v335
    %v337 = vrcp.pop %v306
    %v338 = vmul.f32 %v306, %v337
    %v339 = vsub.f32 1.0, %v338
    %v340 = vmul.f32 %v337, %v339
    %v341 = vadd.f32 %v337, %v340
    %vm342 = vweird.f32 %v306
    %vm343 = vweird.f32 %v337
    %vm344 = vmor %vm342, %vm343
    %v345 = vsel %vm344, %v337, %v341
    %v346 = vand.u32 2147483647, %v306
    %vm347 = vcmp.eq.f32.partialorder %v346, 8.507059e+37
    %v348 = vand.u32 %v306, 2147483648
    %v349 = vor.u32 1.1754944e-38, %v348
    %v350 = vsel %vm347, %v349, %v345
    %v351 = vmul.f32 1.0, %v350
    %v352 = vperm.slane %v177, 1
    %v353 = vadd.f32 %v168, %v352
    %v354 = vadd.f32 %v171, %v352
    %v355 = vadd.f32 %v174, %v352
    %vm356 = vcmp.ge.f32.partialorder %v353, 0.0
    %vm357 = vcmp.ge.f32.partialorder %v354, 0.0
    %vm358 = vcmp.ge.f32.partialorder %v355, 0.0
    %v359 = vmul.f32 %v256, %v353
    %v360 = vmul.f32 %v256, %v354
    %v361 = vmul.f32 %v256, %v355
    %v362 = vsel %vm356, %v353, %v359
    %v363 = vsel %vm357, %v354, %v360
    %v364 = vsel %vm358, %v355, %v361
    %v365 = vmul.f32 %v362, %v321
    %v366 = vmul.f32 %v363, %v336
    %v367 = vmul.f32 %v364, %v351
    %v368 = vadd.f32 %v41, %v365
    %v369 = vadd.f32 %v42, %v366
    %v370 = vadd.f32 %v43, %v367
    %v371 = vmul.f32 %v368, %v368
    %v372 = vmul.f32 %v369, %v369
    %v373 = vmul.f32 %v370, %v370
    %374 = vadd.xlane.f32.xlu0 %v371
    %v375 = vpop.xlane.xlu0 %374
    %376 = vadd.xlane.f32.xlu0 %v372
    %v377 = vpop.xlane.xlu0 %376
    %v378 = vsel %vm60, %v373, 0.0
    %379 = vadd.xlane.f32.xlu0 %v378
    %v380 = vpop.xlane.xlu0 %379
    %v381 = vadd.f32 %v279, %v375
    %v382 = vadd.f32 %v280, %v377
    %v383 = vadd.f32 %v281, %v380
    %v384 = vrsqrt.pop %v381
    %v385 = vmul.f32 %v384, %v381
    %v386 = vmul.f32 %v385, %v384
    %v387 = vmul.f32 0.5, %v386
    %v388 = vsub.f32 1.5, %v387
    %v389 = vmul.f32 %v384, %v388
    %vm390 = vweird.f32 %v381
    %vm391 = vweird.f32 %v384
    %vm392 = vmor %vm390, %vm391
    %v393 = vsel %vm392, %v384, %v389
    %v394 = vrsqrt.pop %v382
    %v395 = vmul.f32 %v394, %v382
    %v396 = vmul.f32 %v395, %v394
    %v397 = vmul.f32 0.5, %v396
    %v398 = vsub.f32 1.5, %v397
    %v399 = vmul.f32 %v394, %v398
    %vm400 = vweird.f32 %v382
    %vm401 = vweird.f32 %v394
    %vm402 = vmor %vm400, %vm401
    %v403 = vsel %vm402, %v394, %v399
    %v404 = vrsqrt.pop %v383
    %v405 = vmul.f32 %v404, %v383
    %v406 = vmul.f32 %v405, %v404
    %v407 = vmul.f32 0.5, %v406
    %v408 = vsub.f32 1.5, %v407
    %v409 = vmul.f32 %v404, %v408
    %vm410 = vweird.f32 %v383
    %vm411 = vweird.f32 %v404
    %vm412 = vmor %vm410, %vm411
    %v413 = vsel %vm412, %v404, %v409
    %v414 = vmul.f32 %v266, %v393
    %v415 = vmul.f32 %v267, %v403
    %v416 = vmul.f32 %v268, %v413
    %417 = vst [vmem:[%s6] sm:$0xff] %v414
    %418 = vst [vmem:[%s6 + $0x8] sm:$0xff] %v415
    %419 = vst [vmem:[%s6 + $0x10] sm:$0xf] %v416
    %v420 = vmul.f32 %v368, %v393
    %v421 = vmul.f32 %v369, %v403
    %v422 = vmul.f32 %v370, %v413
    %s423 = scalar_lea.vmem %s6, 24
    %424 = vst [vmem:[%s423] sm:$0xff] %v420
    %425 = vst [vmem:[%s423 + $0x8] sm:$0xff] %v421
    %426 = vst [vmem:[%s423 + $0x10] sm:$0xf] %v422
    // Predicated region
    $region30: #{entnet_forward.1} parent=1 // pred_check
      _
    $region31: #{entnet_forward.1} parent=1 // pred_check_branch
      %428 = sbr.rel (0) target = $region33
    $region32: #{entnet_forward.1} parent=1 // pred_region
      _
    $region33: #{entnet_forward.1} parent=1 // pred_fallthru
      _
    // Predicated region
    $region34: #{entnet_forward.1} parent=1 // pred_check
      _
    $region35: #{entnet_forward.1} parent=1 // pred_check_branch
      %430 = sbr.rel (0) target = $region37
    $region36: #{entnet_forward.1} parent=1 // pred_region
      _
    $region37: #{entnet_forward.1} parent=1 // pred_fallthru
      _
    %431 = vsyncpa [#allocation4], 1

</llo_original>
